<compile_context>
chip_gen: v7x
topology: tpu7x:2x2x1
jax: 0.10.0
libtpu: 0.0.40
codegen_flags: <defaults>
</compile_context>

<pallas_src>
import functools

import jax
import jax.numpy as jnp
from jax.experimental import pallas as pl
from jax.experimental.pallas import tpu as pltpu

LANE = 128        # lane granularity (last dim of any block)
M_SUBLANE = 16    # bf16 packs 16 rows per vreg -> pad batch to 16

_TK_MAX = 2816    # cap on the contraction (K) tile: keeps x tiles small and
                  # gives >= ~14 K blocks of pipelining on the 40000-dim layers


def _round_up(n, m):
    return ((n + m - 1) // m) * m


def _pad_to(a, shape):
    widths = [(0, s - d) for d, s in zip(a.shape, shape)]
    if all(w == (0, 0) for w in widths):
        return a
    return jnp.pad(a, widths)


def _vmem_limit_bytes():
    """Per-generation VMEM budget: ~3/4 of physical, capped at 100 MiB.
    v7x (64 MiB) -> 48 MiB; v5e/v6e (128 MiB) -> 96 MiB; fallback 48 MiB."""
    cap = 64 << 20
    try:
        cap = int(getattr(pltpu.get_tpu_info(), "vmem_capacity_bytes", cap))
    except Exception:
        pass
    return max(32 << 20, min(cap * 3 // 4, 100 << 20))


_VMEM_LIMIT = _vmem_limit_bytes()
# bf16 weight tile byte target (Pallas double-buffers it) -> <= 1/4 of limit.
_W_TILE_BYTES = min(12 << 20, _VMEM_LIMIT // 4)


def _pick_tile(dim, gran, max_t):
    """Block size: multiple of `gran`, <= max_t, minimizing padding of `dim`.
    Ties go to the larger block (fewer grid steps)."""
    dim_g = _round_up(dim, gran)
    if dim_g <= max_t:
        return dim_g
    best_t, best_pad = gran, dim_g - dim
    for t in range(2 * gran, max_t + 1, gran):
        pad = _round_up(dim, t) - dim
        if pad < best_pad or (pad == best_pad and t > best_t):
            best_t, best_pad = t, pad
    return best_t


# ----------------------------------------------------------------------------
# Tiled kernel:  out = relu(x @ w + b)   (the big fc1 / fc2 layers)
# Weight comes in as a blocked, tile-contiguous array (nb*kb, tk, tn).
# ----------------------------------------------------------------------------
def _linear_relu_kernel(x_ref, w_ref, b_ref, o_ref, acc_ref):
    k = pl.program_id(1)

    @pl.when(k == 0)
    def _():
        acc_ref[...] = jnp.zeros_like(acc_ref)

    acc_ref[...] += jnp.dot(
        x_ref[...], w_ref[...], preferred_element_type=jnp.float32
    )

    @pl.when(k == pl.num_programs(1) - 1)
    def _():
        o_ref[...] = jnp.maximum(acc_ref[...] + b_ref[...], 0.0).astype(o_ref.dtype)


@functools.partial(jax.jit, static_argnames=("n_out", "kb", "nb"))
def linear_relu(x, w_blk, b_pad, *, n_out, kb, nb):
    """relu(x @ w + b); w_blk is the pre-packed bf16 blocked weight."""
    M = x.shape[0]
    _, tk, tn = w_blk.shape
    Kp, Np = kb * tk, nb * tn

    Mp = _round_up(max(M, 1), M_SUBLANE)
    xp = _pad_to(x.astype(jnp.bfloat16), (Mp, Kp))  # only the tiny activation pads

    grid = (nb, kb)  # K (reduction) innermost; N axis is 'parallel' (>=2 blocks)

    # Advisory cost: this call is dominated by streaming the weight once.
    cost = pl.CostEstimate(
        flops=2 * Mp * Kp * Np,
        transcendentals=0,
        bytes_accessed=int(w_blk.size) * 2 + Mp * Kp * 2 * nb + Np * 4 + Mp * Np * 2,
    )

    out = pl.pallas_call(
        _linear_relu_kernel,
        out_shape=jax.ShapeDtypeStruct((Mp, Np), jnp.bfloat16),
        grid_spec=pltpu.PrefetchScalarGridSpec(
            num_scalar_prefetch=0,
            grid=grid,
            in_specs=[
                pl.BlockSpec((Mp, tk), lambda j, k: (0, k)),
                # One contiguous (tk, tn) tile per step; consecutive k steps
                # read consecutive tiles in memory.
                pl.BlockSpec((pl.Squeezed(), tk, tn),
                             lambda j, k: (j * kb + k, 0, 0)),
                pl.BlockSpec((1, tn), lambda j, k: (0, j)),
            ],
            out_specs=pl.BlockSpec((Mp, tn), lambda j, k: (0, j)),
            scratch_shapes=[pltpu.VMEM((Mp, tn), jnp.float32)],
        ),
        compiler_params=pltpu.CompilerParams(
            dimension_semantics=("parallel", "arbitrary"),
            vmem_limit_bytes=_VMEM_LIMIT,
        ),
        cost_estimate=cost,
    )(xp, w_blk, b_pad)

    return out[:M, :n_out]


# ----------------------------------------------------------------------------
# Fused tail kernel:  out = relu(relu(x @ w3 + b3) @ w4 + b4)
# (fc3 1024->512 and fc4 512->9; weights ~1.2 MiB bf16, fully VMEM resident)
# ----------------------------------------------------------------------------
def _tail_kernel(h_ref, w3_ref, b3_ref, w4_ref, b4_ref, o_ref):
    h3 = jnp.dot(h_ref[...], w3_ref[...], preferred_element_type=jnp.float32)
    h3 = jnp.maximum(h3 + b3_ref[...], 0.0).astype(h_ref.dtype)
    h4 = jnp.dot(h3, w4_ref[...], preferred_element_type=jnp.float32)
    o_ref[...] = jnp.maximum(h4 + b4_ref[...], 0.0).astype(o_ref.dtype)


@functools.partial(jax.jit, static_argnames=("n_out",))
def tail_mlp(x, w3_pad, b3_pad, w4_pad, b4_pad, *, n_out):
    M = x.shape[0]
    K3p, N3p = w3_pad.shape
    K4p, N4p = w4_pad.shape

    Mp = _round_up(max(M, 1), M_SUBLANE)
    xp = _pad_to(x.astype(jnp.bfloat16), (Mp, K3p))

    out = pl.pallas_call(
        _tail_kernel,
        out_shape=jax.ShapeDtypeStruct((Mp, N4p), jnp.float32),
        grid_spec=pltpu.PrefetchScalarGridSpec(
            num_scalar_prefetch=0,
            grid=(1,),
            in_specs=[
                pl.BlockSpec((Mp, K3p), lambda i: (0, 0)),
                pl.BlockSpec((K3p, N3p), lambda i: (0, 0)),
                pl.BlockSpec((1, N3p), lambda i: (0, 0)),
                pl.BlockSpec((K4p, N4p), lambda i: (0, 0)),
                pl.BlockSpec((1, N4p), lambda i: (0, 0)),
            ],
            out_specs=pl.BlockSpec((Mp, N4p), lambda i: (0, 0)),
        ),
        compiler_params=pltpu.CompilerParams(
            dimension_semantics=("arbitrary",),
            vmem_limit_bytes=_VMEM_LIMIT,
        ),
    )(xp, w3_pad, b3_pad, w4_pad, b4_pad)

    return out[:M, :n_out]


# ----------------------------------------------------------------------------
# Parameter init (PyTorch-like Linear init) and one-time packing
# ----------------------------------------------------------------------------
def init_hairnet6_params(key, dims):
    """Raw f32 params; weights stored pre-transposed to (in, out)."""
    raw = []
    for i in range(len(dims) - 1):
        fan_in, fan_out = dims[i], dims[i + 1]
        key, kw, kb = jax.random.split(key, 3)
        bound = 1.0 / float(fan_in) ** 0.5
        w = jax.random.uniform(kw, (fan_in, fan_out), jnp.float32, -bound, bound)
        b = jax.random.uniform(kb, (fan_out,), jnp.float32, -bound, bound)
        raw.append((w, b))
    return raw


def pack_hairnet6_params(raw_params):
    """One-time pack: bf16 cast, minimal padding, tile-blocked weight layout
    for the big layers, plain padded layout for the fused VMEM-resident tail.
    NOTE: bf16 weights/activations (f32 MXU accumulation) is a deliberate
    bandwidth/precision tradeoff for the 40000-wide contractions."""
    n_layers = len(raw_params)
    packed, meta = [], []
    for idx, (w, b) in enumerate(raw_params):
        K, N = w.shape
        fused_tail = idx >= n_layers - 2
        if fused_tail:
            Kp, Np = _round_up(K, LANE), _round_up(N, LANE)
            w_pad = _pad_to(w.astype(jnp.bfloat16), (Kp, Np))
            b_pad = _pad_to(b.reshape(1, -1).astype(jnp.float32), (1, Np))
            packed.append((w_pad, b_pad))
            meta.append(dict(d_in=K, n_out=N, fused=True))
            continue

        tk = _pick_tile(K, LANE, _TK_MAX)
        max_tn = max(LANE, (_W_TILE_BYTES // (2 * tk)) // LANE * LANE)
        tn = _pick_tile(N, LANE, max_tn)
        Kp, Np = _round_up(K, tk), _round_up(N, tn)
        kb, nb = Kp // tk, Np // tn
        if nb == 1 and Np >= 2 * LANE and Np % (2 * LANE) == 0:
            # Keep >= 2 N blocks so the parallel N axis can shard across
            # v7x's two TensorCores (nearly free elsewhere).
            tn //= 2
            nb = 2

        # Blocked, tile-contiguous layout: tile (j, k) lives at index j*kb + k,
        # so each weight fetch is a single contiguous (tk, tn) burst and the
        # inner K loop streams sequentially through HBM.  (bf16 first: no big
        # f32 copy ever materializes.)
        w_pad = _pad_to(w.astype(jnp.bfloat16), (Kp, Np))
        w_blk = (
            w_pad.reshape(kb, tk, nb, tn)
            .transpose(2, 0, 1, 3)
            .reshape(nb * kb, tk, tn)
        )
        b_pad = _pad_to(b.reshape(1, -1).astype(jnp.float32), (1, Np))
        packed.append((w_blk, b_pad))
        meta.append(dict(d_in=K, n_out=N, kb=kb, nb=nb, fused=False))
    return packed, meta


# ----------------------------------------------------------------------------
# HairNet6 forward pass
# ----------------------------------------------------------------------------
def hairnet6_forward(x, packed, meta):
    d_in = meta[0]["d_in"]
    h = x.reshape(-1, d_in)  # matches x.view(-1, 1, d_in); size-1 dim re-added below

    for i in range(len(packed) - 2):
        (w_blk, b_pad), m = packed[i], meta[i]
        h = linear_relu(h, w_blk, b_pad, n_out=m["n_out"], kb=m["kb"], nb=m["nb"])

    (w3, b3), (w4, b4) = packed[-2], packed[-1]
    out = tail_mlp(h, w3, b3, w4, b4, n_out=meta[-1]["n_out"])
    return out.reshape(out.shape[0], 1, out.shape[1])


# ----------------------------------------------------------------------------
# Pure-JAX reference (same bf16 weight/activation quantization, f32 accum)
# ----------------------------------------------------------------------------
def hairnet6_ref(x, raw_params):
    d_in = raw_params[0][0].shape[0]
    h = x.reshape(-1, d_in).astype(jnp.bfloat16)
    n = len(raw_params)
    for i, (w, b) in enumerate(raw_params):
        y = jnp.dot(h, w.astype(jnp.bfloat16), preferred_element_type=jnp.float32) + b
        y = jnp.maximum(y, 0.0)
        h = y.astype(jnp.bfloat16) if i < n - 1 else y
    return h.reshape(h.shape[0], 1, h.shape[1])


if __name__ == "__main__":
    key = jax.random.PRNGKey(0)

    # Scaled-down HairNet6 for the demo: 16x16 image -> 256 features, then the
    # same topology as the original (fc1: D->D, fc2: D->1024, fc3: 1024->512,
    # fc4: 512->9).  The real 200x200 / 40000-dim model uses the same kernels.
    B, IMG = 2, 16
    D0 = IMG * IMG
    dims = (D0, D0, 1024, 512, 9)

    key, kx = jax.random.split(key)
    x = jax.random.normal(kx, (B, 1, IMG, IMG), jnp.float32)

    raw_params = init_hairnet6_params(key, dims)
    packed, meta = pack_hairnet6_params(raw_params)

    out = hairnet6_forward(x, packed, meta)
    out = jax.block_until_ready(out)

    ref = hairnet6_ref(x, raw_params)
    assert out.shape == (B, 1, dims[-1]), out.shape
    assert jnp.allclose(out, ref, atol=1e-2, rtol=1e-2), (
        "mismatch vs reference, max abs err = %f"
        % float(jnp.max(jnp.abs(out - ref)))
    )

    print("KERNEL_OK")
</pallas_src>

<mosaic_0001>
module attributes {stable_mosaic.version = 11 : i64} {
  func.func @_linear_relu_kernel(%arg0: i32, %arg1: i32, %arg2: memref<16x256xbf16, #tpu.memory_space<vmem>>, %arg3: memref<1x256x128xbf16, #tpu.memory_space<vmem>>, %arg4: memref<1x128xf32, #tpu.memory_space<vmem>>, %arg5: memref<16x128xbf16, #tpu.memory_space<vmem>>, %arg6: memref<16x128xf32, #tpu.memory_space<vmem>>) attributes {dimension_semantics = [#tpu.dimension_semantics<parallel>, #tpu.dimension_semantics<arbitrary>], iteration_bounds = array<i64: 2, 1>, scalar_prefetch = 0 : i64, scratch_operands = 1 : i64, tpu.core_type = #tpu.core_type<tc>, window_params = [{transform_indices = @transform_0, window_bounds = array<i64: 16, 256>}, {transform_indices = @transform_1, window_bounds = array<i64: 1, 256, 128>}, {transform_indices = @transform_2, window_bounds = array<i64: 1, 128>}, {transform_indices = @transform_3, window_bounds = array<i64: 16, 128>}]} {
    %c0_i32 = arith.constant 0 : i32
    %0 = arith.cmpi eq, %arg1, %c0_i32 : i32
    %1 = arith.extui %0 : i1 to i32
    %c0_i32_0 = arith.constant 0 : i32
    %2 = arith.cmpi ne, %1, %c0_i32_0 : i32
    scf.if %2 {
      %cst_11 = arith.constant 0.000000e+00 : f32
      %13 = vector.broadcast %cst_11 : f32 to vector<16x128xf32>
      %c0_12 = arith.constant 0 : index
      %c0_13 = arith.constant 0 : index
      %14 = vector.load %arg6[%c0_12, %c0_13] : memref<16x128xf32, #tpu.memory_space<vmem>>, vector<16x128xf32>
      tpu.vector_store %arg6[%c0_12, %c0_13], %13 {strides = array<i32>} : memref<16x128xf32, #tpu.memory_space<vmem>>, vector<16x128xf32>,
    } else {
    }
    %c0 = arith.constant 0 : index
    %c0_1 = arith.constant 0 : index
    %3 = vector.load %arg6[%c0, %c0_1] : memref<16x128xf32, #tpu.memory_space<vmem>>, vector<16x128xf32>
    %c0_2 = arith.constant 0 : index
    %c0_3 = arith.constant 0 : index
    %4 = vector.load %arg2[%c0_2, %c0_3] : memref<16x256xbf16, #tpu.memory_space<vmem>>, vector<16x256xbf16>
    %c0_4 = arith.constant 0 : index
    %c0_5 = arith.constant 0 : index
    %c0_6 = arith.constant 0 : index
    %5 = vector.load %arg3[%c0_4, %c0_5, %c0_6] : memref<1x256x128xbf16, #tpu.memory_space<vmem>>, vector<1x256x128xbf16>
    %6 = vector.shape_cast %5 : vector<1x256x128xbf16> to vector<256x128xbf16>
    %cst = arith.constant dense<0.000000e+00> : vector<16x128xf32>
    %7 = tpu.matmul %4, %6, %cst {dimension_numbers = #tpu.dot_dimension_numbers<[1], [0], [0], [1], [0, 0, 1, 1], [], []>} : vector<16x256xbf16>, vector<256x128xbf16>, vector<16x128xf32> -> vector<16x128xf32>
    %8 = arith.addf %3, %7 : vector<16x128xf32>
    %c0_7 = arith.constant 0 : index
    %c0_8 = arith.constant 0 : index
    %9 = vector.load %arg6[%c0_7, %c0_8] : memref<16x128xf32, #tpu.memory_space<vmem>>, vector<16x128xf32>
    tpu.vector_store %arg6[%c0_7, %c0_8], %8 {strides = array<i32>} : memref<16x128xf32, #tpu.memory_space<vmem>>, vector<16x128xf32>,
    %c0_i32_9 = arith.constant 0 : i32
    %10 = arith.cmpi eq, %arg1, %c0_i32_9 : i32
    %11 = arith.extui %10 : i1 to i32
    %c0_i32_10 = arith.constant 0 : i32
    %12 = arith.cmpi ne, %11, %c0_i32_10 : i32
    scf.if %12 {
      %c0_11 = arith.constant 0 : index
      %c0_12 = arith.constant 0 : index
      %13 = vector.load %arg6[%c0_11, %c0_12] : memref<16x128xf32, #tpu.memory_space<vmem>>, vector<16x128xf32>
      %c0_13 = arith.constant 0 : index
      %c0_14 = arith.constant 0 : index
      %14 = vector.load %arg4[%c0_13, %c0_14] : memref<1x128xf32, #tpu.memory_space<vmem>>, vector<1x128xf32>
      %15 = vector.broadcast %14 : vector<1x128xf32> to vector<16x128xf32>
      %16 = arith.addf %13, %15 : vector<16x128xf32>
      %cst_15 = arith.constant 0.000000e+00 : f32
      %17 = vector.broadcast %cst_15 : f32 to vector<16x128xf32>
      %18 = arith.maximumf %16, %17 : vector<16x128xf32>
      %19 = arith.truncf %18 : vector<16x128xf32> to vector<16x128xbf16>
      %c0_16 = arith.constant 0 : index
      %c0_17 = arith.constant 0 : index
      %20 = vector.load %arg5[%c0_16, %c0_17] : memref<16x128xbf16, #tpu.memory_space<vmem>>, vector<16x128xbf16>
      tpu.vector_store %arg5[%c0_16, %c0_17], %19 {strides = array<i32>} : memref<16x128xbf16, #tpu.memory_space<vmem>>, vector<16x128xbf16>,
    } else {
    }
    return
  }
  func.func @transform_0(%arg0: i32, %arg1: i32) -> (i32, i32) {
    %c0_i32 = arith.constant 0 : i32
    %c0_i32_0 = arith.constant 0 : i32
    return %c0_i32, %arg1 : i32, i32
  }
  func.func @transform_1(%arg0: i32, %arg1: i32) -> (i32, i32, i32) {
    %c1_i32 = arith.constant 1 : i32
    %0 = arith.muli %arg0, %c1_i32 : i32
    %1 = arith.addi %0, %arg1 : i32
    %c0_i32 = arith.constant 0 : i32
    %c0_i32_0 = arith.constant 0 : i32
    %c0_i32_1 = arith.constant 0 : i32
    return %1, %c0_i32, %c0_i32_0 : i32, i32, i32
  }
  func.func @transform_2(%arg0: i32, %arg1: i32) -> (i32, i32) {
    %c0_i32 = arith.constant 0 : i32
    %c0_i32_0 = arith.constant 0 : i32
    return %c0_i32, %arg0 : i32, i32
  }
  func.func @transform_3(%arg0: i32, %arg1: i32) -> (i32, i32) {
    %c0_i32 = arith.constant 0 : i32
    %c0_i32_0 = arith.constant 0 : i32
    return %c0_i32, %arg0 : i32, i32
  }
}

</mosaic_0001>

<llo_original>
// kernel: linear_relu.1
$region0: #{linear_relu.1}
  #allocation0 [shape = 'u32[]', space=smem, size = 0x4, offset = 0x4, fixed_abs, tag = 'smem constant byte address 0x4 - core index']
  #allocation1 [shape = 'u32[144,128]{1,0:T(1,128)}', space=vmem, size = 0x12000, scoped, tag = 'internal scratch']
  #allocation2 [shape = 'f32[16,128]{1,0:T(8,128)}', space=vmem, size = 0x2000, scoped, tag = 'scratch operand']
  %s0 = inlined_call_operand.vmem [shape: bf16[16,256], index: 0, kind: input, shape index: {}]
  %s1 = inlined_call_operand.hbm [shape: bf16[2,256,128], index: 1, kind: input, shape index: {}]
  %s2 = inlined_call_operand.vmem [shape: f32[1,256], index: 2, kind: input, shape index: {}]
  %s3 = inlined_call_operand.vmem [shape: bf16[16,256], index: 3, kind: output, shape index: {}]
  %s4 = sld [smem:[#allocation0]]
  $region94: #{linear_relu.1} parent=0
    _
  %s6 = ssub.s32 1, %s4
  %s7 = scalar_select 0, %s6, %s4
  $region1: #{linear_relu.1} parent=0
    #allocation3 [shape = 'u8[131072]{0}', space=vmem, size = 0x20000, scoped, tag = 'input window, operand 1']
    #allocation4 [shape = 's32[2]{0}', space=sflag, size = 0x8, scoped, tag = 'scoped memory for linear_relu.1']
    #allocation5 [shape = 'u8[8192]{0}', space=vmem, size = 0x2000, scoped, tag = 'output window, operand 0']
    %8 = vsyncpa [#allocation4], 0
    %s9 = scalar_lea.sflag [#allocation4], 1
    %10 = vsyncpa %s9, 0
    loop: start=0, step=1, limit=4
    $region2: #{linear_relu.1} parent=1 // loop_pre_header
      _
    $region3: #{linear_relu.1} parent=1 // loop_header
      %s12 = sphi 0, %s16
      %p13 = scmp.ge.s32.totalorder %s12, 4
      %s19 = sphi 0, %s31
      %s20 = sphi 0, %s27
      %s21 = sphi 0, %s19
      %s22 = sphi 0, %s20
      %s23 = sphi 0, %s21
      %s24 = sphi 0, %s22
      %s34 = sphi 0, %s36
      %s37 = sphi 0, %s34
      %s38 = sphi 0, %s37
      %s54 = sphi 0, %s38
      %s62 = sphi 0, %s64
      %s65 = sphi 0, %s62
      %s66 = sphi 0, %s65
      %s82 = sphi 0, %s66
      %s88 = sphi 0, %s90
      %s91 = sphi 0, %s88
      %s92 = sphi 0, %s91
      %s108 = sphi 0, %s92
      %s114 = sphi 0, %s116
      %s117 = sphi 0, %s114
      %s118 = sphi 0, %s117
      %s134 = sphi 0, %s118
    $region4: #{linear_relu.1} parent=1 // loop_header_branch
      %15 = sbr.rel (%p13) target = $region8
    $region5: #{linear_relu.1} parent=1 // loop_body
      %s17 = ssub.s32 %s12, 1
      %s18 = ssub.s32 %s12, 2
      %s25 = sadd.s32 1, %s20
      %p26 = scmp.ge.s32.totalorder %s25, 1
      %s27 = scalar_select %p26, 0, %s25
      %s28 = sadd.s32 1, %s19
      %s29 = scalar_select %p26, %s28, %s19
      %p30 = scmp.ge.s32.totalorder %s29, 2
      %s31 = scalar_select %p30, 0, %s29
      %s32 = ssub.s32 %s20, %s27
      %p33 = scmp.eq.s32.totalorder %s32, 0
      %s35 = sadd.s32 %s34, 1
      %s36 = scalar_select %p33, %s34, %s35
      %p39 = pneg %p33
      %p40 = scmp.eq.s32.totalorder %s12, 1
      %p41 = por %p39, %p40
      %p42 = scmp.ne.s32.totalorder %s34, %s37
      %p43 = scmp.eq.s32.totalorder %s12, 0
      %p44 = por %p42, %p43
      %p45 = scmp.ne.s32.totalorder %s34, %s37
      %p46 = scmp.eq.s32.totalorder %s17, 1
      %p47 = por %p45, %p46
      %p48 = scmp.ne.s32.totalorder %s37, %s38
      %p49 = scmp.eq.s32.totalorder %s17, 0
      %p50 = por %p48, %p49
      %p51 = scmp.ne.s32.totalorder %s37, %s38
      %p52 = scmp.eq.s32.totalorder %s18, 1
      %p53 = por %p51, %p52
      %p55 = scmp.ne.s32.totalorder %s38, %s54
      %p56 = scmp.eq.s32.totalorder %s18, 0
      %p57 = por %p55, %p56
      %s58 = sadd.s32 %s19, %s20
      %s59 = sadd.s32 %s31, %s27
      %s60 = ssub.s32 %s58, %s59
      %p61 = scmp.eq.s32.totalorder %s60, 0
      %s63 = sadd.s32 %s62, 1
      %s64 = scalar_select %p61, %s62, %s63
      %p67 = pneg %p61
      %p68 = scmp.eq.s32.totalorder %s12, 1
      %p69 = por %p67, %p68
      %p70 = scmp.ne.s32.totalorder %s62, %s65
      %p71 = scmp.eq.s32.totalorder %s12, 0
      %p72 = por %p70, %p71
      %p73 = scmp.ne.s32.totalorder %s62, %s65
      %p74 = scmp.eq.s32.totalorder %s17, 1
      %p75 = por %p73, %p74
      %p76 = scmp.ne.s32.totalorder %s65, %s66
      %p77 = scmp.eq.s32.totalorder %s17, 0
      %p78 = por %p76, %p77
      %p79 = scmp.ne.s32.totalorder %s65, %s66
      %p80 = scmp.eq.s32.totalorder %s18, 1
      %p81 = por %p79, %p80
      %p83 = scmp.ne.s32.totalorder %s66, %s82
      %p84 = scmp.eq.s32.totalorder %s18, 0
      %p85 = por %p83, %p84
      %s86 = ssub.s32 %s19, %s31
      %p87 = scmp.eq.s32.totalorder %s86, 0
      %s89 = sadd.s32 %s88, 1
      %s90 = scalar_select %p87, %s88, %s89
      %p93 = pneg %p87
      %p94 = scmp.eq.s32.totalorder %s12, 1
      %p95 = por %p93, %p94
      %p96 = scmp.ne.s32.totalorder %s88, %s91
      %p97 = scmp.eq.s32.totalorder %s12, 0
      %p98 = por %p96, %p97
      %p99 = scmp.ne.s32.totalorder %s88, %s91
      %p100 = scmp.eq.s32.totalorder %s17, 1
      %p101 = por %p99, %p100
      %p102 = scmp.ne.s32.totalorder %s91, %s92
      %p103 = scmp.eq.s32.totalorder %s17, 0
      %p104 = por %p102, %p103
      %p105 = scmp.ne.s32.totalorder %s91, %s92
      %p106 = scmp.eq.s32.totalorder %s18, 1
      %p107 = por %p105, %p106
      %p109 = scmp.ne.s32.totalorder %s92, %s108
      %p110 = scmp.eq.s32.totalorder %s18, 0
      %p111 = por %p109, %p110
      %s112 = ssub.s32 %s19, %s31
      %p113 = scmp.eq.s32.totalorder %s112, 0
      %s115 = sadd.s32 %s114, 1
      %s116 = scalar_select %p113, %s114, %s115
      %p119 = pneg %p113
      %p120 = scmp.eq.s32.totalorder %s12, 1
      %p121 = por %p119, %p120
      %p122 = scmp.ne.s32.totalorder %s114, %s117
      %p123 = scmp.eq.s32.totalorder %s12, 0
      %p124 = por %p122, %p123
      %p125 = scmp.ne.s32.totalorder %s114, %s117
      %p126 = scmp.eq.s32.totalorder %s17, 1
      %p127 = por %p125, %p126
      %p128 = scmp.ne.s32.totalorder %s117, %s118
      %p129 = scmp.eq.s32.totalorder %s17, 0
      %p130 = por %p128, %p129
      %p131 = scmp.ne.s32.totalorder %s117, %s118
      %p132 = scmp.eq.s32.totalorder %s18, 1
      %p133 = por %p131, %p132
      %p135 = scmp.ne.s32.totalorder %s118, %s134
      %p136 = scmp.eq.s32.totalorder %s18, 0
      %p137 = por %p135, %p136
      %p138 = scmp.le.s32.totalorder 1, %s12
      %p139 = scmp.lt.s32.totalorder %s12, 3
      %p140 = pnand %p138, %p139
      %p141 = pneg %p140
      // Predicated region
      $region9: #{linear_relu.1} parent=5 // pred_check
        _
      $region10: #{linear_relu.1} parent=5 // pred_check_branch
        %143 = sbr.rel (%p140) target = $region12
      $region11: #{linear_relu.1} parent=5 // pred_region
        %s144 = ssub.s32 %s12, 1
        // Predicated region
        $region13: #{linear_relu.1} parent=11 // pred_check
          %p145 = pneg %p50
        $region14: #{linear_relu.1} parent=11 // pred_check_branch
          %147 = sbr.rel (%p145) target = $region16
        $region15: #{linear_relu.1} parent=11 // pred_region
          %s148 = smul.u32 2, %s22
          %p149 = scmp.lt.s32.totalorder %s148, 1
          %s150 = scalar_select %p149, %s148, 1
          %s151 = smul.addr %s150, 4
          %s152 = scalar_lea.vmem %s0, %s151
          %s153 = smul.u32 2, %s22
        $region16: #{linear_relu.1} parent=11 // pred_fallthru
          _
      $region12: #{linear_relu.1} parent=5 // pred_fallthru
        _
      %p154 = scmp.lt.s32.totalorder %s12, 2
      // Predicated region
      $region17: #{linear_relu.1} parent=5 // pred_check
        %p155 = pneg %p154
      $region18: #{linear_relu.1} parent=5 // pred_check_branch
        %157 = sbr.rel (%p155) target = $region20
      $region19: #{linear_relu.1} parent=5 // pred_region
        // Predicated region
        $region21: #{linear_relu.1} parent=19 // pred_check
          %p158 = pneg %p72
        $region22: #{linear_relu.1} parent=19 // pred_check_branch
          %160 = sbr.rel (%p158) target = $region24
        $region23: #{linear_relu.1} parent=19 // pred_region
          %s161 = sand.u32 %s62, 1
          %s162 = scalar_lea.sflag [#allocation4], %s161
          %s163 = sand.u32 %s62, 1
          %s164 = smul.addr %s163, 128
          %s165 = scalar_lea.vmem [#allocation3], %s164
          %s166 = sadd.s32 %s19, %s20
          %s168 = ssub.s32 2048, 2048
          %169 = vsyncadd %s162, %s168
          %s170 = smul.addr %s166, 32
          %s171 = smul.addr %s170, 64
          %s172 = scalar_lea.hbm %s1, %s171
          %s173 = sshll.u32 %s165, 4
          %s174 = int_to_ptr.vmem [resolvable:$true] %s173
          %179 = dma.hbm_to_vmem [thread:$0]  %s172, 2048, %s174, %s162, 64, 64, 4
        $region24: #{linear_relu.1} parent=19 // pred_fallthru
          _
        // Predicated region
        $region25: #{linear_relu.1} parent=19 // pred_check
          %p180 = pneg %p98
        $region26: #{linear_relu.1} parent=19 // pred_check_branch
          %182 = sbr.rel (%p180) target = $region28
        $region27: #{linear_relu.1} parent=19 // pred_region
          %p183 = scmp.lt.s32.totalorder %s19, 1
          %s184 = scalar_select %p183, %s19, 1
          %s185 = scalar_lea.vmem %s2, %s184
        $region28: #{linear_relu.1} parent=19 // pred_fallthru
          _
      $region20: #{linear_relu.1} parent=5 // pred_fallthru
        _
      %p186 = scmp.le.s32.totalorder 1, %s12
      %p187 = scmp.lt.s32.totalorder %s12, 3
      %p188 = pnand %p186, %p187
      %p189 = pneg %p188
      // Predicated region
      $region29: #{linear_relu.1} parent=5 // pred_check
        _
      $region30: #{linear_relu.1} parent=5 // pred_check_branch
        %191 = sbr.rel (%p188) target = $region32
      $region31: #{linear_relu.1} parent=5 // pred_region
        %s192 = ssub.s32 %s12, 1
        %s193 = sand.u32 %s65, 1
        %s194 = scalar_lea.sflag [#allocation4], %s193
        %s195 = sand.u32 %s65, 1
        %s196 = smul.addr %s195, 128
        %s197 = scalar_lea.vmem [#allocation3], %s196
        // Predicated region
        $region33: #{linear_relu.1} parent=31 // pred_check
          %p198 = pneg %p78
        $region34: #{linear_relu.1} parent=31 // pred_check_branch
          %200 = sbr.rel (%p198) target = $region36
        $region35: #{linear_relu.1} parent=31 // pred_region
          %201 = dma.done %s194, 2048
        $region36: #{linear_relu.1} parent=31 // pred_fallthru
          _
        %s202 = smul.u32 2, %s22
        %p203 = scmp.lt.s32.totalorder %s202, 1
        %s204 = scalar_select %p203, %s202, 1
        %s205 = smul.addr %s204, 4
        %s206 = scalar_lea.vmem %s0, %s205
        %p207 = pneg %p50
        %p208 = pneg %p47
        %s209 = sand.u32 %s65, 1
        %s210 = scalar_lea.sflag [#allocation4], %s209
        %s211 = sand.u32 %s65, 1
        %s212 = smul.addr %s211, 128
        %s213 = scalar_lea.vmem [#allocation3], %s212
        %p214 = pneg %p78
        %p215 = pneg %p75
        %p216 = scmp.lt.s32.totalorder %s21, 1
        %s217 = scalar_select %p216, %s21, 1
        %s218 = scalar_lea.vmem %s2, %s217
        %p219 = pneg %p104
        %p220 = pneg %p101
        %p221 = pneg %p130
        %p222 = pneg %p127
        %s223 = sand.u32 %s117, 1
        %s224 = sand.u32 %s117, 1
        %s225 = smul.addr %s224, 8
        %s226 = scalar_lea.vmem [#allocation5], %s225
        %s227 = smul.u32 2, %s22
        %p228 = scmp.lt.s32.totalorder %s227, 1
        %s229 = scalar_select %p228, %s227, 1
        %s230 = smul.addr %s229, 4
        %s231 = scalar_lea.vmem %s0, %s230
        %s232 = smul.u32 2, %s22
        %s233 = sadd.s32 %s21, %s22
        %p234 = scmp.lt.s32.totalorder %s21, 1
        %s235 = scalar_select %p234, %s21, 1
        %s236 = scalar_lea.vmem %s2, %s235
        %p238 = scmp.eq.s32.totalorder %s22, 0
        // Predicated region
        $region37: #{linear_relu.1} parent=31 // pred_check
          %p239 = pneg %p238
        $region38: #{linear_relu.1} parent=31 // pred_check_branch
          %241 = sbr.rel (%p239) target = $region40
        $region39: #{linear_relu.1} parent=31 // pred_region
          %242 = vst [vmem:[#allocation2] sm:$0xff] 0.0
          %243 = vst [vmem:[#allocation2 + $0x8] sm:$0xff] 0.0
        $region40: #{linear_relu.1} parent=31 // pred_fallthru
          _
        %v244 = vld [vmem:[#allocation2] sm:$0xff]
        %v245 = vld [vmem:[#allocation2 + $0x8] sm:$0xff]
        %v246 = vld [vmem:[%s231] sm:$0xff]
        %v247 = vld [vmem:[%s231 + $0x8] sm:$0xff]
        %v248 = vld [vmem:[%s197] sm:$0xf]
        %v249 = vld [vmem:[%s197 + $0x4] sm:$0xf]
        %v250 = vld [vmem:[%s197 + $0x8] sm:$0xf]
        %v251 = vld [vmem:[%s197 + $0xc] sm:$0xf]
        %v252 = vld [vmem:[%s197 + $0x10] sm:$0xf]
        %v253 = vld [vmem:[%s197 + $0x14] sm:$0xf]
        %v254 = vld [vmem:[%s197 + $0x18] sm:$0xf]
        %v255 = vld [vmem:[%s197 + $0x1c] sm:$0xf]
        %v256 = vld [vmem:[%s197 + $0x20] sm:$0xf]
        %v257 = vld [vmem:[%s197 + $0x24] sm:$0xf]
        %v258 = vld [vmem:[%s197 + $0x28] sm:$0xf]
        %v259 = vld [vmem:[%s197 + $0x2c] sm:$0xf]
        %v260 = vld [vmem:[%s197 + $0x30] sm:$0xf]
        %v261 = vld [vmem:[%s197 + $0x34] sm:$0xf]
        %v262 = vld [vmem:[%s197 + $0x38] sm:$0xf]
        %v263 = vld [vmem:[%s197 + $0x3c] sm:$0xf]
        %v264 = vld [vmem:[%s197 + $0x40] sm:$0xf]
        %v265 = vld [vmem:[%s197 + $0x44] sm:$0xf]
        %v266 = vld [vmem:[%s197 + $0x48] sm:$0xf]
        %v267 = vld [vmem:[%s197 + $0x4c] sm:$0xf]
        %v268 = vld [vmem:[%s197 + $0x50] sm:$0xf]
        %v269 = vld [vmem:[%s197 + $0x54] sm:$0xf]
        %v270 = vld [vmem:[%s197 + $0x58] sm:$0xf]
        %v271 = vld [vmem:[%s197 + $0x5c] sm:$0xf]
        %v272 = vld [vmem:[%s197 + $0x60] sm:$0xf]
        %v273 = vld [vmem:[%s197 + $0x64] sm:$0xf]
        %v274 = vld [vmem:[%s197 + $0x68] sm:$0xf]
        %v275 = vld [vmem:[%s197 + $0x6c] sm:$0xf]
        %v276 = vld [vmem:[%s197 + $0x70] sm:$0xf]
        %v277 = vld [vmem:[%s197 + $0x74] sm:$0xf]
        %v278 = vld [vmem:[%s197 + $0x78] sm:$0xf]
        %v279 = vld [vmem:[%s197 + $0x7c] sm:$0xf]
        %v282 = vunpack.c.l.b16 %v246
        %v283 = vunpack.c.h.b16 %v246
        %v284 = vunpack.c.l.b16 %v247
        %v285 = vunpack.c.h.b16 %v247
        %v286 = vpack.c.b16 %v284, %v282
        %v287 = vpack.c.b16 %v285, %v283
        %v322 = vunpack.c.l.b16 %v248
        %v323 = vunpack.c.l.b16 %v249
        %v324 = vunpack.c.l.b16 %v250
        %v325 = vunpack.c.l.b16 %v251
        %v326 = vunpack.c.l.b16 %v252
        %v327 = vunpack.c.l.b16 %v253
        %v328 = vunpack.c.l.b16 %v254
        %v329 = vunpack.c.l.b16 %v255
        %v330 = vunpack.c.l.b16 %v256
        %v331 = vunpack.c.l.b16 %v257
        %v332 = vunpack.c.l.b16 %v258
        %v333 = vunpack.c.l.b16 %v259
        %v334 = vunpack.c.l.b16 %v260
        %v335 = vunpack.c.l.b16 %v261
        %v336 = vunpack.c.l.b16 %v262
        %v337 = vunpack.c.l.b16 %v263
        %v338 = vunpack.c.l.b16 %v264
        %v339 = vunpack.c.l.b16 %v265
        %v340 = vunpack.c.l.b16 %v266
        %v341 = vunpack.c.l.b16 %v267
        %v342 = vunpack.c.l.b16 %v268
        %v343 = vunpack.c.l.b16 %v269
        %v344 = vunpack.c.l.b16 %v270
        %v345 = vunpack.c.l.b16 %v271
        %v346 = vunpack.c.l.b16 %v272
        %v347 = vunpack.c.l.b16 %v273
        %v348 = vunpack.c.l.b16 %v274
        %v349 = vunpack.c.l.b16 %v275
        %v350 = vunpack.c.l.b16 %v276
        %v351 = vunpack.c.l.b16 %v277
        %v352 = vunpack.c.l.b16 %v278
        %v353 = vunpack.c.l.b16 %v279
        %v354 = vpack.c.b16 %v323, %v322
        %v355 = vpack.c.b16 %v325, %v324
        %v356 = vpack.c.b16 %v327, %v326
        %v357 = vpack.c.b16 %v329, %v328
        %v358 = vpack.c.b16 %v331, %v330
        %v359 = vpack.c.b16 %v333, %v332
        %v360 = vpack.c.b16 %v335, %v334
        %v361 = vpack.c.b16 %v337, %v336
        %v362 = vpack.c.b16 %v339, %v338
        %v363 = vpack.c.b16 %v341, %v340
        %v364 = vpack.c.b16 %v343, %v342
        %v365 = vpack.c.b16 %v345, %v344
        %v366 = vpack.c.b16 %v347, %v346
        %v367 = vpack.c.b16 %v349, %v348
        %v368 = vpack.c.b16 %v351, %v350
        %v369 = vpack.c.b16 %v353, %v352
        %386 = vmatprep.subr.bf16.mxu0 0
        %387 = vmatpush1.bf16.msra.mxu0 %v354
        %388 = vmatprep.subr.bf16.mxu0 0
        %389 = vmatpush1.bf16.msra.mxu0 %v355
        %390 = vmatprep.subr.bf16.mxu0 0
        %391 = vmatpush1.bf16.msra.mxu0 %v356
        %392 = vmatprep.subr.bf16.mxu0 0
        %393 = vmatpush1.bf16.msra.mxu0 %v357
        %394 = vmatprep.subr.bf16.mxu0 0
        %395 = vmatpush1.bf16.msra.mxu0 %v358
        %396 = vmatprep.subr.bf16.mxu0 0
        %397 = vmatpush1.bf16.msra.mxu0 %v359
        %398 = vmatprep.subr.bf16.mxu0 0
        %399 = vmatpush1.bf16.msra.mxu0 %v360
        %400 = vmatprep.subr.bf16.mxu0 0
        %401 = vmatpush1.bf16.msra.mxu0 %v361
        %402 = vmatprep.subr.bf16.mxu0 0
        %403 = vmatpush1.bf16.msra.mxu0 %v362
        %404 = vmatprep.subr.bf16.mxu0 0
        %405 = vmatpush1.bf16.msra.mxu0 %v363
        %406 = vmatprep.subr.bf16.mxu0 0
        %407 = vmatpush1.bf16.msra.mxu0 %v364
        %408 = vmatprep.subr.bf16.mxu0 0
        %409 = vmatpush1.bf16.msra.mxu0 %v365
        %410 = vmatprep.subr.bf16.mxu0 0
        %411 = vmatpush1.bf16.msra.mxu0 %v366
        %412 = vmatprep.subr.bf16.mxu0 0
        %413 = vmatpush1.bf16.msra.mxu0 %v367
        %414 = vmatprep.subr.bf16.mxu0 0
        %415 = vmatpush1.bf16.msra.mxu0 %v368
        %416 = vmatprep.subr.bf16.mxu0 0
        %417 = vmatpush1.bf16.msra.mxu0 %v369
        %418 = vmatprep.mubr.bf16.mxu0 %v287
        %419 = vmatmul.mubr.bf16.gmra.mrb[0].mxu0 %v286
        %v420 = vpop.f32.mrb[0].mxu0
        %v421 = vadd.f32 0.0, %v420
        %v422 = vpop.f32.mrb[0].mxu0
        %v423 = vpop.f32.mrb[0].mxu0
        %v424 = vadd.f32 0.0, %v423
        %v425 = vpop.f32.mrb[0].mxu0
        %426 = vdwg.mxu0
        %v427 = vadd.f32 %v244, %v421
        %v428 = vadd.f32 %v245, %v424
        %429 = vst [vmem:[#allocation2] sm:$0xff] %v427
        %430 = vst [vmem:[#allocation2 + $0x8] sm:$0xff] %v428
        // Predicated region
        $region41: #{linear_relu.1} parent=31 // pred_check
          %p431 = pneg %p238
        $region42: #{linear_relu.1} parent=31 // pred_check_branch
          %433 = sbr.rel (%p431) target = $region44
        $region43: #{linear_relu.1} parent=31 // pred_region
          %v434 = vld [vmem:[#allocation2] sm:$0xff]
          %v435 = vld [vmem:[#allocation2 + $0x8] sm:$0xff]
          %v436 = vld [vmem:[%s236] sm:$0x1]
          %v438 = vlaneseq
          %v439 = vshrl.u32 %v438, 7
          %v440 = vsub.s32 0, %v439
          %v441 = vrot.slane %v436, %v440
          %v443 = vadd.f32 %v434, %v441
          %v444 = vadd.f32 %v435, %v441
          %v445 = vmax.f32 %v443, 0.0
          %v446 = vmax.f32 %v444, 0.0
          %v447 = vpack.c.bf16 %v446, %v445
          %v449 = vunpack.c.l.b16 %v447
          %v450 = vunpack.c.h.b16 %v447
          %v451 = vpack.c.b16 %v449, %v449
          %v452 = vpack.c.b16 %v450, %v450
          %455 = vst [vmem:[%s226] sm:$0xf] %v451
          %456 = vst [vmem:[%s226 + $0x4] sm:$0xf] %v452
        $region44: #{linear_relu.1} parent=31 // pred_fallthru
          _
        %s457 = sand.u32 %s117, 1
        %s458 = sand.u32 %s117, 1
        %s459 = smul.addr %s458, 8
        %s460 = scalar_lea.vmem [#allocation5], %s459
        // Predicated region
        $region45: #{linear_relu.1} parent=31 // pred_check
          %p461 = pneg %p127
        $region46: #{linear_relu.1} parent=31 // pred_check_branch
          %463 = sbr.rel (%p461) target = $region48
        $region47: #{linear_relu.1} parent=31 // pred_region
          %s464 = smul.addr %s21, 4
          %s465 = scalar_lea.vmem %s3, %s464
          // Predicated region
          $region49: #{linear_relu.1} parent=47 // pred_check
            _
          $region50: #{linear_relu.1} parent=47 // pred_check_branch
            %467 = sbr.rel (0) target = $region52
          $region51: #{linear_relu.1} parent=47 // pred_region
            // Predicated region
            $region53: #{linear_relu.1} parent=51 // pred_check
              _
            $region54: #{linear_relu.1} parent=51 // pred_check_branch
              %469 = sbr.rel target = $region56
            $region55: #{linear_relu.1} parent=51 // pred_region
              // Predicated region
              $region68: #{linear_relu.1} parent=55 // pred_check
                _
              $region69: #{linear_relu.1} parent=55 // pred_check_branch
                %486 = sbr.rel (0) target = $region71
              $region70: #{linear_relu.1} parent=55 // pred_region
                loop: start=0, step=1, limit=1
                $region72: #{linear_relu.1} parent=70 // loop_pre_header
                  _
                $region73: #{linear_relu.1} parent=70 // loop_header
                  %s488 = sphi 0, %s492
                  %p489 = scmp.ge.s32.totalorder %s488, 1
                  %s493 = sphi %s460, %s460
                  %s494 = sphi %s465, %s465
                $region74: #{linear_relu.1} parent=70 // loop_header_branch
                  %491 = sbr.rel (%p489) target = $region78
                $region75: #{linear_relu.1} parent=70 // loop_body
                  _
                $region76: #{linear_relu.1} parent=70 // loop_footer
                  %s492 = sadd.s32 1, %s488
                $region77: #{linear_relu.1} parent=70 // loop_footer_branch
                  %487 = sbr.rel target = $region73
                $region78: #{linear_relu.1} parent=70 // loop_exit
                  _
                loop: start=0, step=1, limit=1
                $region79: #{linear_relu.1} parent=70 // loop_pre_header
                  _
                $region80: #{linear_relu.1} parent=70 // loop_header
                  %s497 = sphi 0, %s501
                  %p498 = scmp.ge.s32.totalorder %s497, 1
                  %s502 = sphi %s460, %s460
                  %s503 = sphi %s465, %s465
                $region81: #{linear_relu.1} parent=70 // loop_header_branch
                  %500 = sbr.rel (%p498) target = $region85
                $region82: #{linear_relu.1} parent=70 // loop_body
                  %v504 = vld [vmem:[%s502] sm:$0xf]
                  %505 = vst [vmem:[%s503] sm:$0xf] %v504
                  %v506 = vld [vmem:[%s502 + $0x4] sm:$0xf]
                  %507 = vst [vmem:[%s503 + $0x8] sm:$0xf] %v506
                $region83: #{linear_relu.1} parent=70 // loop_footer
                  %s501 = sadd.s32 1, %s497
                $region84: #{linear_relu.1} parent=70 // loop_footer_branch
                  %496 = sbr.rel target = $region80
                $region85: #{linear_relu.1} parent=70 // loop_exit
                  _
              $region71: #{linear_relu.1} parent=55 // pred_fallthru
                _
            $region56: #{linear_relu.1} parent=51 // pred_fallthru
              _
            // Predicated region
            $region57: #{linear_relu.1} parent=51 // pred_check
              _
            $region58: #{linear_relu.1} parent=51 // pred_check_branch
              %471 = sbr.rel (0) target = $region60
            $region59: #{linear_relu.1} parent=51 // pred_region
              loop: start=0, step=1, limit=1
              $region61: #{linear_relu.1} parent=59 // loop_pre_header
                _
              $region62: #{linear_relu.1} parent=59 // loop_header
                %s474 = sphi 0, %s478
                %p475 = scmp.ge.s32.totalorder %s474, 1
                %s479 = sphi %s460, %s460
                %s480 = sphi %s465, %s465
              $region63: #{linear_relu.1} parent=59 // loop_header_branch
                %477 = sbr.rel (%p475) target = $region67
              $region64: #{linear_relu.1} parent=59 // loop_body
                %v481 = vld [vmem:[%s479] sm:$0xf]
                %482 = vst [vmem:[%s480] sm:$0xf] %v481
                %v483 = vld [vmem:[%s479 + $0x4] sm:$0xf]
                %484 = vst [vmem:[%s480 + $0x8] sm:$0xf] %v483
              $region65: #{linear_relu.1} parent=59 // loop_footer
                %s478 = sadd.s32 1, %s474
              $region66: #{linear_relu.1} parent=59 // loop_footer_branch
                %473 = sbr.rel target = $region62
              $region67: #{linear_relu.1} parent=59 // loop_exit
                _
            $region60: #{linear_relu.1} parent=51 // pred_fallthru
              _
          $region52: #{linear_relu.1} parent=47 // pred_fallthru
            _
          %508 = vnop
        $region48: #{linear_relu.1} parent=31 // pred_fallthru
          _
      $region32: #{linear_relu.1} parent=5 // pred_fallthru
        _
      %p509 = scmp.le.s32.totalorder 2, %s12
      // Predicated region
      $region86: #{linear_relu.1} parent=5 // pred_check
        %p510 = pneg %p509
      $region87: #{linear_relu.1} parent=5 // pred_check_branch
        %512 = sbr.rel (%p510) target = $region89
      $region88: #{linear_relu.1} parent=5 // pred_region
        %s513 = ssub.s32 %s12, 2
        // Predicated region
        $region90: #{linear_relu.1} parent=88 // pred_check
          %p514 = pneg %p133
        $region91: #{linear_relu.1} parent=88 // pred_check_branch
          %516 = sbr.rel (%p514) target = $region93
        $region92: #{linear_relu.1} parent=88 // pred_region
          %s517 = sand.u32 %s118, 1
          %s518 = sand.u32 %s118, 1
          %s519 = smul.addr %s518, 8
          %s520 = scalar_lea.vmem [#allocation5], %s519
        $region93: #{linear_relu.1} parent=88 // pred_fallthru
          _
      $region89: #{linear_relu.1} parent=5 // pred_fallthru
        _
    $region6: #{linear_relu.1} parent=1 // loop_footer
      %s16 = sadd.s32 1, %s12
    $region7: #{linear_relu.1} parent=1 // loop_footer_branch
      %11 = sbr.rel target = $region3
    $region8: #{linear_relu.1} parent=1 // loop_exit
      _
    %521 = vsyncpa [#allocation4], 1
    %s522 = scalar_lea.sflag [#allocation4], 1
    %523 = vsyncpa %s522, 1

</llo_original>
